<compile_context>
chip_gen: v5e
topology: v5e:2x2
jax: 0.10.0
libtpu: 0.0.40
codegen_flags: <defaults>
</compile_context>

<pallas_src>
import jax
import jax.numpy as jnp
import numpy as np
from jax.experimental import pallas as pl
from jax.experimental.pallas import tpu as pltpu

N_NODES = 16
IN_CH = 1          # forced to 1 by the module's gate computation
HID_CH = 1         # forced to 1 by the module's gate computation
OUT_CH = 8

# ---- VMEM packed vector-parameter tile: (PV_ROWS, OUT_CH) f32 ----
PV_ROWS = 8
_ROW_W2T = 0       # conv2.W as a (OUT,) row   (x1 @ W2^T == x1 * w2t)
_ROW_B2 = 1        # conv2.W bias
_ROW_U2T = 2       # conv2.U as a (OUT,) row
_ROW_BU2 = 3       # conv2.U bias
_ROW_WFC = 4       # fc weight as a (OUT,) row

# ---- SMEM scalar-parameter vector (f32) ----
NUM_SC = 8
_SC_W1, _SC_B1, _SC_U1, _SC_BU1, _SC_BFC = 0, 1, 2, 3, 4


def ggcn_kernel(sc_ref, pv_ref, x_ref, adj_ref, out_ref):
    # True scalars live in SMEM: scalar-slot reads, no vreg broadcast tiles.
    w1 = sc_ref[_SC_W1]
    b1 = sc_ref[_SC_B1]
    u1 = sc_ref[_SC_U1]
    bu1 = sc_ref[_SC_BU1]
    bfc = sc_ref[_SC_BFC]

    # (OUT,)-wide parameter rows from the resident VMEM tile.
    pv = pv_ref[...]                                    # (PV_ROWS, OUT_CH)
    w2t = pv[_ROW_W2T, :]
    b2 = pv[_ROW_B2, :]
    u2t = pv[_ROW_U2T, :]
    bu2 = pv[_ROW_BU2, :]
    wfc = pv[_ROW_WFC, :]

    xr = x_ref[...]                                     # (G, 1, N) lane-dense over nodes
    adj = adj_ref[...]                                  # (G, N, N)
    G = adj.shape[0]

    x = xr[:, 0, :]                                     # (G, N)

    # VPU broadcast-multiply + XLU lane-reduce instead of MXU matvecs.
    rs = jnp.sum(adj, axis=-1)                          # (G, N)  rowsum(adj)
    ax = jnp.sum(adj * xr, axis=-1)                     # (G, N)  adj @ x

    # ---- conv1 (in=1 -> hid=1): adj @ (w1*x + b1) = w1*(adj@x) + b1*rowsum ----
    m1 = w1 * ax + b1 * rs
    r1 = jax.nn.sigmoid(u1 * x + bu1)
    x1 = jnp.maximum(m1 * r1, 0.0)                      # (G, N)

    # ---- conv2 (hid=1 -> out): adj @ (x1*w2 + b2) = (adj@x1)*w2 + rowsum*b2 ----
    ax1 = jnp.sum(adj * x1[:, None, :], axis=-1)        # (G, N)
    m2 = ax1[..., None] * w2t + rs[..., None] * b2      # (G, N, OUT)
    r2 = jax.nn.sigmoid(x1[..., None] * u2t + bu2)      # (G, N, OUT)
    x2 = jnp.maximum(m2 * r2, 0.0)                      # (G, N, OUT)

    # ---- mean over nodes, fc head, gates (sigmoids stay on the EUP slot) ----
    xm = jnp.mean(x2, axis=1)                           # (G, OUT)
    y = jnp.sum(xm * wfc, axis=-1, keepdims=True) + bfc  # (G, 1)
    g1 = jax.nn.sigmoid(u1 * y + bu1)                   # (G, 1)
    g2 = jax.nn.sigmoid(y * u2t + bu2)                  # (G, OUT)

    # Single packed store per block -> one writeback per G graphs.
    row_y = jnp.broadcast_to(y[:, :, None], (G, 1, OUT_CH))
    row_g1 = jnp.broadcast_to(g1[:, :, None], (G, 1, OUT_CH))
    out_ref[...] = jnp.concatenate([row_y, row_g1, g2[:, None, :]], axis=1)


def pack_params(params):
    """Split the 10 weight/bias tensors into (SMEM scalar vector, VMEM tile)."""
    (W1, b1, U1, bU1, W2, b2, U2, bU2, Wfc, bfc) = params
    sc = jnp.zeros((NUM_SC,), jnp.float32)
    sc = sc.at[_SC_W1].set(W1[0, 0])
    sc = sc.at[_SC_B1].set(b1[0])
    sc = sc.at[_SC_U1].set(U1[0, 0])
    sc = sc.at[_SC_BU1].set(bU1[0])
    sc = sc.at[_SC_BFC].set(bfc[0])

    pv = jnp.zeros((PV_ROWS, OUT_CH), jnp.float32)
    pv = pv.at[_ROW_W2T].set(W2[:, 0])
    pv = pv.at[_ROW_B2].set(b2)
    pv = pv.at[_ROW_U2T].set(U2[:, 0])
    pv = pv.at[_ROW_BU2].set(bU2)
    pv = pv.at[_ROW_WFC].set(Wfc[0, :])
    return sc, pv


def _graphs_per_block(B, max_g=1024):
    """Largest divisor of B <= max_g; prefer grid length >= 2 (v7x megacore)."""
    g = min(B, max_g)
    while B % g:
        g -= 1
    if g == B and B > 1:
        for cand in range(B // 2, 0, -1):
            if B % cand == 0:
                return cand
    return g


def ggcn_forward_batched(x, adj, params, graphs_per_block=None):
    """x: (B, N, IN_CH) f32, adj: (B, N, N) f32.
    Returns (y (B, 1), gate1 (B, HID_CH), gate2 (B, OUT_CH))."""
    B, N, in_ch = x.shape
    assert in_ch == IN_CH == 1 and HID_CH == 1, (
        "GatedGraphConvNet's gate computation requires in_channels == hidden_channels == 1")
    assert adj.shape == (B, N, N)

    sc, pv = pack_params(params)
    G = graphs_per_block or _graphs_per_block(B)
    assert B % G == 0
    num_blocks = B // G

    # Lane-dense node axis: x as (B, 1, N) so adj*x broadcasts with no transpose.
    x_lane = x.reshape(B, 1, N)

    # Advisory cost hint for the whole (batched) call.
    flops = B * (6 * N * N + 14 * N * OUT_CH + 4 * OUT_CH)
    transcendentals = B * (N * (1 + OUT_CH) + 1 + OUT_CH)
    bytes_accessed = (B * 4 * (N * N + N + 3 * OUT_CH)
                      + 4 * (PV_ROWS * OUT_CH + NUM_SC))

    out = pl.pallas_call(
        ggcn_kernel,
        grid=(num_blocks,),
        in_specs=[
            # true scalars -> SMEM (scalar slot), no vreg broadcast tiles
            pl.BlockSpec(memory_space=pltpu.MemorySpace.SMEM),
            # vector params: constant block index -> resident, one tiny DMA
            pl.BlockSpec((PV_ROWS, OUT_CH), lambda b: (0, 0)),
            # G graphs per step, pipelined across the batch
            pl.BlockSpec((G, 1, N), lambda b: (b, 0, 0)),
            pl.BlockSpec((G, N, N), lambda b: (b, 0, 0)),
        ],
        out_specs=pl.BlockSpec((G, 3, OUT_CH), lambda b: (b, 0, 0)),
        out_shape=jax.ShapeDtypeStruct((B, 3, OUT_CH), jnp.float32),
        compiler_params=pltpu.CompilerParams(
            dimension_semantics=("parallel",)),
        cost_estimate=pl.CostEstimate(
            flops=flops,
            transcendentals=transcendentals,
            bytes_accessed=bytes_accessed),
    )(sc, pv, x_lane, adj)

    y = out[:, 0, 0:1]                 # (B, 1)
    g1 = out[:, 1, 0:HID_CH]           # (B, HID_CH)
    g2 = out[:, 2, :]                  # (B, OUT_CH)
    return y, g1, g2


def ggcn_forward(x, adj, params):
    """Single-graph entry point matching the PyTorch module (x: (N, 1), adj: (N, N))."""
    y, g1, g2 = ggcn_forward_batched(x[None], adj[None], params)
    return y[0], g1[0], g2[0]


def ggcn_reference(x, adj, params):
    """Pure-JAX mirror of the PyTorch forward pass (for validation)."""
    (W1, b1, U1, bU1, W2, b2, U2, bU2, Wfc, bfc) = params
    h = x @ W1.T + b1
    m = adj @ h
    r = jax.nn.sigmoid(x @ U1.T + bU1)
    x1 = jax.nn.relu(m * r)
    h2 = x1 @ W2.T + b2
    m2 = adj @ h2
    r2 = jax.nn.sigmoid(x1 @ U2.T + bU2)
    x2 = jax.nn.relu(m2 * r2)
    xm = jnp.mean(x2, axis=0)
    y = xm @ Wfc.T + bfc
    g1 = jax.nn.sigmoid(y @ U1.T + bU1)
    g2 = jax.nn.sigmoid(y @ U2.T + bU2)
    return y, g1, g2


def init_params(key):
    ks = jax.random.split(key, 10)

    def lin(kw, kb, out_f, in_f):
        bound = 1.0 / np.sqrt(in_f)
        W = jax.random.uniform(kw, (out_f, in_f), jnp.float32, -bound, bound)
        b = jax.random.uniform(kb, (out_f,), jnp.float32, -bound, bound)
        return W, b

    W1, b1 = lin(ks[0], ks[1], HID_CH, IN_CH)      # conv1.W
    U1, bU1 = lin(ks[2], ks[3], HID_CH, IN_CH)     # conv1.U
    W2, b2 = lin(ks[4], ks[5], OUT_CH, HID_CH)     # conv2.W
    U2, bU2 = lin(ks[6], ks[7], OUT_CH, HID_CH)    # conv2.U
    Wfc, bfc = lin(ks[8], ks[9], 1, OUT_CH)        # fc
    return (W1, b1, U1, bU1, W2, b2, U2, bU2, Wfc, bfc)


if __name__ == "__main__":
    key = jax.random.PRNGKey(0)
    k_params, k_x, k_adj = jax.random.split(key, 3)

    params = init_params(k_params)

    B = 8
    x = jax.random.normal(k_x, (B, N_NODES, IN_CH), jnp.float32)
    # symmetric 0/1 adjacency with self-loops, per graph
    a = (jax.random.uniform(k_adj, (B, N_NODES, N_NODES)) > 0.7).astype(jnp.float32)
    adj = jnp.clip(a + jnp.swapaxes(a, -1, -2)
                   + jnp.eye(N_NODES, dtype=jnp.float32)[None], 0.0, 1.0)

    y, g1, g2 = jax.block_until_ready(ggcn_forward_batched(x, adj, params))

    for i in range(B):
        y_r, g1_r, g2_r = ggcn_reference(x[i], adj[i], params)
        np.testing.assert_allclose(np.asarray(y[i]), np.asarray(y_r), rtol=1e-5, atol=1e-5)
        np.testing.assert_allclose(np.asarray(g1[i]), np.asarray(g1_r), rtol=1e-5, atol=1e-5)
        np.testing.assert_allclose(np.asarray(g2[i]), np.asarray(g2_r), rtol=1e-5, atol=1e-5)

    print("KERNEL_OK")
</pallas_src>

<mosaic_0001>
module attributes {stable_mosaic.version = 11 : i64} {
  func.func @ggcn_kernel(%arg0: i32, %arg1: memref<8xf32, #tpu.memory_space<smem>>, %arg2: memref<8x8xf32, #tpu.memory_space<vmem>>, %arg3: memref<4x1x16xf32, #tpu.memory_space<vmem>>, %arg4: memref<4x16x16xf32, #tpu.memory_space<vmem>>, %arg5: memref<4x3x8xf32, #tpu.memory_space<vmem>>) attributes {dimension_semantics = [#tpu.dimension_semantics<parallel>], iteration_bounds = array<i64: 2>, scalar_prefetch = 0 : i64, scratch_operands = 0 : i64, tpu.core_type = #tpu.core_type<tc>, window_params = [{transform_indices = @transform_0, window_bounds = array<i64: 8>}, {pipeline_mode = #tpu.pipeline_mode<synchronous>, transform_indices = @transform_1, window_bounds = array<i64: 8, 8>}, {transform_indices = @transform_2, window_bounds = array<i64: 4, 1, 16>}, {transform_indices = @transform_3, window_bounds = array<i64: 4, 16, 16>}, {transform_indices = @transform_4, window_bounds = array<i64: 4, 3, 8>}]} {
    %c0 = arith.constant 0 : index
    %0 = memref.load %arg1[%c0] : memref<8xf32, #tpu.memory_space<smem>>
    %c1 = arith.constant 1 : index
    %1 = memref.load %arg1[%c1] : memref<8xf32, #tpu.memory_space<smem>>
    %c2 = arith.constant 2 : index
    %2 = memref.load %arg1[%c2] : memref<8xf32, #tpu.memory_space<smem>>
    %c3 = arith.constant 3 : index
    %3 = memref.load %arg1[%c3] : memref<8xf32, #tpu.memory_space<smem>>
    %c4 = arith.constant 4 : index
    %4 = memref.load %arg1[%c4] : memref<8xf32, #tpu.memory_space<smem>>
    %c0_0 = arith.constant 0 : index
    %c0_1 = arith.constant 0 : index
    %5 = vector.load %arg2[%c0_0, %c0_1] : memref<8x8xf32, #tpu.memory_space<vmem>>, vector<8x8xf32>
    %6 = vector.extract_strided_slice %5 {offsets = [0, 0], sizes = [1, 8], strides = [1, 1]} : vector<8x8xf32> to vector<1x8xf32>
    %7 = vector.shape_cast %6 : vector<1x8xf32> to vector<8xf32>
    %8 = vector.extract_strided_slice %5 {offsets = [1, 0], sizes = [1, 8], strides = [1, 1]} : vector<8x8xf32> to vector<1x8xf32>
    %9 = vector.shape_cast %8 : vector<1x8xf32> to vector<8xf32>
    %10 = vector.extract_strided_slice %5 {offsets = [2, 0], sizes = [1, 8], strides = [1, 1]} : vector<8x8xf32> to vector<1x8xf32>
    %11 = vector.shape_cast %10 : vector<1x8xf32> to vector<8xf32>
    %12 = vector.extract_strided_slice %5 {offsets = [3, 0], sizes = [1, 8], strides = [1, 1]} : vector<8x8xf32> to vector<1x8xf32>
    %13 = vector.shape_cast %12 : vector<1x8xf32> to vector<8xf32>
    %14 = vector.extract_strided_slice %5 {offsets = [4, 0], sizes = [1, 8], strides = [1, 1]} : vector<8x8xf32> to vector<1x8xf32>
    %15 = vector.shape_cast %14 : vector<1x8xf32> to vector<8xf32>
    %c0_2 = arith.constant 0 : index
    %c0_3 = arith.constant 0 : index
    %c0_4 = arith.constant 0 : index
    %16 = vector.load %arg3[%c0_2, %c0_3, %c0_4] : memref<4x1x16xf32, #tpu.memory_space<vmem>>, vector<4x1x16xf32>
    %c0_5 = arith.constant 0 : index
    %c0_6 = arith.constant 0 : index
    %c0_7 = arith.constant 0 : index
    %17 = vector.load %arg4[%c0_5, %c0_6, %c0_7] : memref<4x16x16xf32, #tpu.memory_space<vmem>>, vector<4x16x16xf32>
    %18 = vector.shape_cast %16 : vector<4x1x16xf32> to vector<4x16xf32>
    %cst = arith.constant dense<0.000000e+00> : vector<4x16xf32>
    %19 = vector.multi_reduction <add>, %17, %cst [2] : vector<4x16x16xf32> to vector<4x16xf32>
    %20 = vector.broadcast %16 : vector<4x1x16xf32> to vector<4x16x16xf32>
    %21 = arith.mulf %17, %20 : vector<4x16x16xf32>
    %cst_8 = arith.constant dense<0.000000e+00> : vector<4x16xf32>
    %22 = vector.multi_reduction <add>, %21, %cst_8 [2] : vector<4x16x16xf32> to vector<4x16xf32>
    %23 = vector.broadcast %0 : f32 to vector<4x16xf32>
    %24 = arith.mulf %23, %22 : vector<4x16xf32>
    %25 = vector.broadcast %1 : f32 to vector<4x16xf32>
    %26 = arith.mulf %25, %19 : vector<4x16xf32>
    %27 = arith.addf %24, %26 : vector<4x16xf32>
    %28 = vector.broadcast %2 : f32 to vector<4x16xf32>
    %29 = arith.mulf %28, %18 : vector<4x16xf32>
    %30 = vector.broadcast %3 : f32 to vector<4x16xf32>
    %31 = arith.addf %29, %30 : vector<4x16xf32>
    %32 = arith.negf %31 : vector<4x16xf32>
    %33 = math.exp %32 : vector<4x16xf32>
    %cst_9 = arith.constant 1.000000e+00 : f32
    %34 = vector.broadcast %cst_9 : f32 to vector<4x16xf32>
    %35 = arith.addf %34, %33 : vector<4x16xf32>
    %36 = arith.divf %34, %35 : vector<4x16xf32>
    %37 = arith.mulf %27, %36 : vector<4x16xf32>
    %cst_10 = arith.constant 0.000000e+00 : f32
    %38 = vector.broadcast %cst_10 : f32 to vector<4x16xf32>
    %39 = arith.maximumf %37, %38 : vector<4x16xf32>
    %40 = vector.shape_cast %39 : vector<4x16xf32> to vector<4x1x16xf32>
    %41 = vector.broadcast %40 : vector<4x1x16xf32> to vector<4x16x16xf32>
    %42 = arith.mulf %17, %41 : vector<4x16x16xf32>
    %cst_11 = arith.constant dense<0.000000e+00> : vector<4x16xf32>
    %43 = vector.multi_reduction <add>, %42, %cst_11 [2] : vector<4x16x16xf32> to vector<4x16xf32>
    %44 = vector.shape_cast %43 : vector<4x16xf32> to vector<4x16x1xf32>
    %45 = vector.shape_cast %7 : vector<8xf32> to vector<1x1x8xf32>
    %46 = vector.broadcast %44 : vector<4x16x1xf32> to vector<4x16x8xf32>
    %47 = vector.broadcast %45 : vector<1x1x8xf32> to vector<4x16x8xf32>
    %48 = arith.mulf %46, %47 : vector<4x16x8xf32>
    %49 = vector.shape_cast %19 : vector<4x16xf32> to vector<4x16x1xf32>
    %50 = vector.shape_cast %9 : vector<8xf32> to vector<1x1x8xf32>
    %51 = vector.broadcast %49 : vector<4x16x1xf32> to vector<4x16x8xf32>
    %52 = vector.broadcast %50 : vector<1x1x8xf32> to vector<4x16x8xf32>
    %53 = arith.mulf %51, %52 : vector<4x16x8xf32>
    %54 = arith.addf %48, %53 : vector<4x16x8xf32>
    %55 = vector.shape_cast %39 : vector<4x16xf32> to vector<4x16x1xf32>
    %56 = vector.shape_cast %11 : vector<8xf32> to vector<1x1x8xf32>
    %57 = vector.broadcast %55 : vector<4x16x1xf32> to vector<4x16x8xf32>
    %58 = vector.broadcast %56 : vector<1x1x8xf32> to vector<4x16x8xf32>
    %59 = arith.mulf %57, %58 : vector<4x16x8xf32>
    %60 = vector.shape_cast %13 : vector<8xf32> to vector<1x1x8xf32>
    %61 = vector.broadcast %60 : vector<1x1x8xf32> to vector<4x16x8xf32>
    %62 = arith.addf %59, %61 : vector<4x16x8xf32>
    %63 = arith.negf %62 : vector<4x16x8xf32>
    %64 = math.exp %63 : vector<4x16x8xf32>
    %cst_12 = arith.constant 1.000000e+00 : f32
    %65 = vector.broadcast %cst_12 : f32 to vector<4x16x8xf32>
    %66 = arith.addf %65, %64 : vector<4x16x8xf32>
    %67 = arith.divf %65, %66 : vector<4x16x8xf32>
    %68 = arith.mulf %54, %67 : vector<4x16x8xf32>
    %cst_13 = arith.constant 0.000000e+00 : f32
    %69 = vector.broadcast %cst_13 : f32 to vector<4x16x8xf32>
    %70 = arith.maximumf %68, %69 : vector<4x16x8xf32>
    %cst_14 = arith.constant dense<0.000000e+00> : vector<4x8xf32>
    %71 = vector.multi_reduction <add>, %70, %cst_14 [1] : vector<4x16x8xf32> to vector<4x8xf32>
    %cst_15 = arith.constant 1.600000e+01 : f32
    %72 = vector.broadcast %cst_15 : f32 to vector<4x8xf32>
    %73 = arith.divf %71, %72 : vector<4x8xf32>
    %74 = vector.shape_cast %15 : vector<8xf32> to vector<1x8xf32>
    %75 = vector.broadcast %74 : vector<1x8xf32> to vector<4x8xf32>
    %76 = arith.mulf %73, %75 : vector<4x8xf32>
    %cst_16 = arith.constant dense<0.000000e+00> : vector<4xf32>
    %77 = vector.multi_reduction <add>, %76, %cst_16 [1] : vector<4x8xf32> to vector<4xf32>
    %78 = vector.shape_cast %77 : vector<4xf32> to vector<4x1xf32>
    %79 = vector.broadcast %4 : f32 to vector<4x1xf32>
    %80 = arith.addf %78, %79 : vector<4x1xf32>
    %81 = vector.broadcast %2 : f32 to vector<4x1xf32>
    %82 = arith.mulf %81, %80 : vector<4x1xf32>
    %83 = vector.broadcast %3 : f32 to vector<4x1xf32>
    %84 = arith.addf %82, %83 : vector<4x1xf32>
    %85 = arith.negf %84 : vector<4x1xf32>
    %86 = math.exp %85 : vector<4x1xf32>
    %cst_17 = arith.constant 1.000000e+00 : f32
    %87 = vector.broadcast %cst_17 : f32 to vector<4x1xf32>
    %88 = arith.addf %87, %86 : vector<4x1xf32>
    %89 = arith.divf %87, %88 : vector<4x1xf32>
    %90 = vector.shape_cast %11 : vector<8xf32> to vector<1x8xf32>
    %91 = vector.broadcast %80 : vector<4x1xf32> to vector<4x8xf32>
    %92 = vector.broadcast %90 : vector<1x8xf32> to vector<4x8xf32>
    %93 = arith.mulf %91, %92 : vector<4x8xf32>
    %94 = vector.shape_cast %13 : vector<8xf32> to vector<1x8xf32>
    %95 = vector.broadcast %94 : vector<1x8xf32> to vector<4x8xf32>
    %96 = arith.addf %93, %95 : vector<4x8xf32>
    %97 = arith.negf %96 : vector<4x8xf32>
    %98 = math.exp %97 : vector<4x8xf32>
    %cst_18 = arith.constant 1.000000e+00 : f32
    %99 = vector.broadcast %cst_18 : f32 to vector<4x8xf32>
    %100 = arith.addf %99, %98 : vector<4x8xf32>
    %101 = arith.divf %99, %100 : vector<4x8xf32>
    %102 = vector.shape_cast %80 : vector<4x1xf32> to vector<4x1x1xf32>
    %103 = vector.shape_cast %102 : vector<4x1x1xf32> to vector<4x1x1xf32>
    %104 = vector.broadcast %103 : vector<4x1x1xf32> to vector<4x1x8xf32>
    %105 = vector.shape_cast %89 : vector<4x1xf32> to vector<4x1x1xf32>
    %106 = vector.shape_cast %105 : vector<4x1x1xf32> to vector<4x1x1xf32>
    %107 = vector.broadcast %106 : vector<4x1x1xf32> to vector<4x1x8xf32>
    %108 = vector.shape_cast %101 : vector<4x8xf32> to vector<4x1x8xf32>
    %109 = tpu.concatenate %104, %107, %108 in 1 : vector<4x1x8xf32>, vector<4x1x8xf32>, vector<4x1x8xf32> -> vector<4x3x8xf32>
    %c0_19 = arith.constant 0 : index
    %c0_20 = arith.constant 0 : index
    %c0_21 = arith.constant 0 : index
    %110 = vector.load %arg5[%c0_19, %c0_20, %c0_21] : memref<4x3x8xf32, #tpu.memory_space<vmem>>, vector<4x3x8xf32>
    tpu.vector_store %arg5[%c0_19, %c0_20, %c0_21], %109 {strides = array<i32>} : memref<4x3x8xf32, #tpu.memory_space<vmem>>, vector<4x3x8xf32>,
    return
  }
  func.func @transform_0(%arg0: i32) -> i32 {
    %c0_i32 = arith.constant 0 : i32
    %c0_i32_0 = arith.constant 0 : i32
    return %c0_i32 : i32
  }
  func.func @transform_1(%arg0: i32) -> (i32, i32) {
    %c0_i32 = arith.constant 0 : i32
    %c0_i32_0 = arith.constant 0 : i32
    %c0_i32_1 = arith.constant 0 : i32
    return %c0_i32, %c0_i32_0 : i32, i32
  }
  func.func @transform_2(%arg0: i32) -> (i32, i32, i32) {
    %c0_i32 = arith.constant 0 : i32
    %c0_i32_0 = arith.constant 0 : i32
    %c0_i32_1 = arith.constant 0 : i32
    return %arg0, %c0_i32, %c0_i32_0 : i32, i32, i32
  }
  func.func @transform_3(%arg0: i32) -> (i32, i32, i32) {
    %c0_i32 = arith.constant 0 : i32
    %c0_i32_0 = arith.constant 0 : i32
    %c0_i32_1 = arith.constant 0 : i32
    return %arg0, %c0_i32, %c0_i32_0 : i32, i32, i32
  }
  func.func @transform_4(%arg0: i32) -> (i32, i32, i32) {
    %c0_i32 = arith.constant 0 : i32
    %c0_i32_0 = arith.constant 0 : i32
    %c0_i32_1 = arith.constant 0 : i32
    return %arg0, %c0_i32, %c0_i32_0 : i32, i32, i32
  }
}

</mosaic_0001>

<llo_original>
// kernel: tpu_custom_call.1
$region0: #{tpu_custom_call.1}
  #allocation0 [shape = 'u32[]', space=smem, size = 0x4, offset = 0x4, fixed_abs, tag = 'smem constant byte address 0x4 - core index']
  #allocation1 [shape = 'u32[72,128]{1,0:T(1,128)}', space=vmem, size = 0x9000, scoped, tag = 'internal scratch']
  %s0 = inlined_call_operand.hbm [shape: f32[8], index: 0, kind: input, shape index: {}]
  %s1 = inlined_call_operand.hbm [shape: f32[8,8], index: 1, kind: input, shape index: {}]
  %s2 = inlined_call_operand.hbm [shape: f32[8,1,16], index: 2, kind: input, shape index: {}]
  %s3 = inlined_call_operand.hbm [shape: f32[8,16,16], index: 3, kind: input, shape index: {}]
  %s4 = inlined_call_operand.vmem [shape: f32[8,3,8], index: 4, kind: output, shape index: {}]
  %s5 = sld [smem:[#allocation0]]
  $region65: #{tpu_custom_call.1} parent=0
    _
  %s7 = ssub.s32 1, %s5
  %s8 = scalar_select 0, %s7, %s5
  $region1: #{tpu_custom_call.1} parent=0
    #allocation2 [shape = 'u8[512]{0}', space=smem, size = 0x200, scoped, tag = 'input window, operand 0, single buffered']
    #allocation3 [shape = 's32[2]{0}', space=sflag, size = 0x8, scoped, tag = 'scoped memory for tpu_custom_call.1']
    #allocation4 [shape = 's32[2]{0}', space=sflag, size = 0x8, scoped, tag = 'scoped memory for tpu_custom_call.1']
    #allocation5 [shape = 'u8[4096]{0}', space=vmem, size = 0x1000, scoped, tag = 'input window, operand 1, single buffered']
    #allocation6 [shape = 'u8[4096]{0}', space=vmem, size = 0x1000, scoped, tag = 'input window, operand 2']
    #allocation7 [shape = 's32[2]{0}', space=sflag, size = 0x8, scoped, tag = 'scoped memory for tpu_custom_call.1']
    #allocation8 [shape = 'u8[65536]{0}', space=vmem, size = 0x10000, scoped, tag = 'input window, operand 3']
    %9 = vsyncpa [#allocation4], 0
    %10 = vsyncpa [#allocation3], 0
    %11 = vsyncpa [#allocation7], 0
    %s12 = scalar_lea.sflag [#allocation7], 1
    %13 = vsyncpa %s12, 0
    loop: start=0, step=1, limit=4
    $region2: #{tpu_custom_call.1} parent=1 // loop_pre_header
      _
    $region3: #{tpu_custom_call.1} parent=1 // loop_header
      %s15 = sphi 0, %s19
      %p16 = scmp.ge.s32.totalorder %s15, 4
      %s23 = sphi 0, %s23
      %s25 = sphi 0, %s23
      %s26 = sphi 0, %s25
      %s40 = sphi 0, %s26
      %s44 = sphi 0, %s44
      %s46 = sphi 0, %s44
      %s47 = sphi 0, %s46
      %s61 = sphi 0, %s47
      %s67 = sphi 0, %s69
      %s70 = sphi 0, %s67
      %s71 = sphi 0, %s70
      %s87 = sphi 0, %s71
      %s93 = sphi 0, %s95
      %s96 = sphi 0, %s93
      %s97 = sphi 0, %s96
      %s113 = sphi 0, %s97
      %s119 = sphi 0, %s121
      %s122 = sphi 0, %s119
      %s123 = sphi 0, %s122
      %s139 = sphi 0, %s123
    $region4: #{tpu_custom_call.1} parent=1 // loop_header_branch
      %18 = sbr.rel (%p16) target = $region8
    $region5: #{tpu_custom_call.1} parent=1 // loop_body
      %s20 = ssub.s32 %s15, 1
      %s21 = ssub.s32 %s15, 2
      %s22 = sadd.s32 %s15, 1
      %s24 = sadd.s32 %s23, 1
      %p27 = scmp.eq.s32.totalorder %s15, 1
      %p28 = scmp.ne.s32.totalorder %s23, %s25
      %p29 = scmp.eq.s32.totalorder %s15, 0
      %p30 = por %p28, %p29
      %p31 = scmp.ne.s32.totalorder %s23, %s25
      %p32 = scmp.eq.s32.totalorder %s20, 1
      %p33 = por %p31, %p32
      %p34 = scmp.ne.s32.totalorder %s25, %s26
      %p35 = scmp.eq.s32.totalorder %s20, 0
      %p36 = por %p34, %p35
      %p37 = scmp.ne.s32.totalorder %s25, %s26
      %p38 = scmp.eq.s32.totalorder %s21, 1
      %p39 = por %p37, %p38
      %p41 = scmp.ne.s32.totalorder %s26, %s40
      %p42 = scmp.eq.s32.totalorder %s21, 0
      %p43 = por %p41, %p42
      %s45 = sadd.s32 %s44, 1
      %p48 = scmp.eq.s32.totalorder %s15, 1
      %p49 = scmp.ne.s32.totalorder %s44, %s46
      %p50 = scmp.eq.s32.totalorder %s15, 0
      %p51 = por %p49, %p50
      %p52 = scmp.ne.s32.totalorder %s44, %s46
      %p53 = scmp.eq.s32.totalorder %s20, 1
      %p54 = por %p52, %p53
      %p55 = scmp.ne.s32.totalorder %s46, %s47
      %p56 = scmp.eq.s32.totalorder %s20, 0
      %p57 = por %p55, %p56
      %p58 = scmp.ne.s32.totalorder %s46, %s47
      %p59 = scmp.eq.s32.totalorder %s21, 1
      %p60 = por %p58, %p59
      %p62 = scmp.ne.s32.totalorder %s47, %s61
      %p63 = scmp.eq.s32.totalorder %s21, 0
      %p64 = por %p62, %p63
      %s65 = ssub.s32 %s15, %s22
      %p66 = scmp.eq.s32.totalorder %s65, 0
      %s68 = sadd.s32 %s67, 1
      %s69 = scalar_select %p66, %s67, %s68
      %p72 = pneg %p66
      %p73 = scmp.eq.s32.totalorder %s15, 1
      %p74 = por %p72, %p73
      %p75 = scmp.ne.s32.totalorder %s67, %s70
      %p76 = scmp.eq.s32.totalorder %s15, 0
      %p77 = por %p75, %p76
      %p78 = scmp.ne.s32.totalorder %s67, %s70
      %p79 = scmp.eq.s32.totalorder %s20, 1
      %p80 = por %p78, %p79
      %p81 = scmp.ne.s32.totalorder %s70, %s71
      %p82 = scmp.eq.s32.totalorder %s20, 0
      %p83 = por %p81, %p82
      %p84 = scmp.ne.s32.totalorder %s70, %s71
      %p85 = scmp.eq.s32.totalorder %s21, 1
      %p86 = por %p84, %p85
      %p88 = scmp.ne.s32.totalorder %s71, %s87
      %p89 = scmp.eq.s32.totalorder %s21, 0
      %p90 = por %p88, %p89
      %s91 = ssub.s32 %s15, %s22
      %p92 = scmp.eq.s32.totalorder %s91, 0
      %s94 = sadd.s32 %s93, 1
      %s95 = scalar_select %p92, %s93, %s94
      %p98 = pneg %p92
      %p99 = scmp.eq.s32.totalorder %s15, 1
      %p100 = por %p98, %p99
      %p101 = scmp.ne.s32.totalorder %s93, %s96
      %p102 = scmp.eq.s32.totalorder %s15, 0
      %p103 = por %p101, %p102
      %p104 = scmp.ne.s32.totalorder %s93, %s96
      %p105 = scmp.eq.s32.totalorder %s20, 1
      %p106 = por %p104, %p105
      %p107 = scmp.ne.s32.totalorder %s96, %s97
      %p108 = scmp.eq.s32.totalorder %s20, 0
      %p109 = por %p107, %p108
      %p110 = scmp.ne.s32.totalorder %s96, %s97
      %p111 = scmp.eq.s32.totalorder %s21, 1
      %p112 = por %p110, %p111
      %p114 = scmp.ne.s32.totalorder %s97, %s113
      %p115 = scmp.eq.s32.totalorder %s21, 0
      %p116 = por %p114, %p115
      %s117 = ssub.s32 %s15, %s22
      %p118 = scmp.eq.s32.totalorder %s117, 0
      %s120 = sadd.s32 %s119, 1
      %s121 = scalar_select %p118, %s119, %s120
      %p124 = pneg %p118
      %p125 = scmp.eq.s32.totalorder %s15, 1
      %p126 = por %p124, %p125
      %p127 = scmp.ne.s32.totalorder %s119, %s122
      %p128 = scmp.eq.s32.totalorder %s15, 0
      %p129 = por %p127, %p128
      %p130 = scmp.ne.s32.totalorder %s119, %s122
      %p131 = scmp.eq.s32.totalorder %s20, 1
      %p132 = por %p130, %p131
      %p133 = scmp.ne.s32.totalorder %s122, %s123
      %p134 = scmp.eq.s32.totalorder %s20, 0
      %p135 = por %p133, %p134
      %p136 = scmp.ne.s32.totalorder %s122, %s123
      %p137 = scmp.eq.s32.totalorder %s21, 1
      %p138 = por %p136, %p137
      %p140 = scmp.ne.s32.totalorder %s123, %s139
      %p141 = scmp.eq.s32.totalorder %s21, 0
      %p142 = por %p140, %p141
      %p143 = scmp.le.s32.totalorder 1, %s15
      %p144 = scmp.lt.s32.totalorder %s15, 3
      %p145 = pnand %p143, %p144
      %p146 = pneg %p145
      // Predicated region
      $region9: #{tpu_custom_call.1} parent=5 // pred_check
        _
      $region10: #{tpu_custom_call.1} parent=5 // pred_check_branch
        %148 = sbr.rel (%p145) target = $region12
      $region11: #{tpu_custom_call.1} parent=5 // pred_region
        %s149 = ssub.s32 %s15, 1
        // Predicated region
        $region13: #{tpu_custom_call.1} parent=11 // pred_check
          %p150 = pneg %p36
        $region14: #{tpu_custom_call.1} parent=11 // pred_check_branch
          %152 = sbr.rel (%p150) target = $region16
        $region15: #{tpu_custom_call.1} parent=11 // pred_region
          %154 = vsyncadd [#allocation4], 0
          %s156 = sshll.u32 %s0, 4
          %s157 = int_to_ptr.hbm [resolvable:$true] %s156
          %159 = dma.hbm_to_smem %s157, 16, [#allocation2], [#allocation4]
        $region16: #{tpu_custom_call.1} parent=11 // pred_fallthru
          _
        // Predicated region
        $region17: #{tpu_custom_call.1} parent=11 // pred_check
          %p160 = pneg %p57
        $region18: #{tpu_custom_call.1} parent=11 // pred_check_branch
          %162 = sbr.rel (%p160) target = $region20
        $region19: #{tpu_custom_call.1} parent=11 // pred_region
          %164 = vsyncadd [#allocation3], 0
          %s166 = sshll.u32 %s1, 4
          %s167 = int_to_ptr.hbm [resolvable:$true] %s166
          %s168 = sshll.u32 [#allocation5], 4
          %s169 = int_to_ptr.vmem [resolvable:$true] %s168
          %171 = dma.hbm_to_vmem [thread:$0]  %s167, 128, %s169, [#allocation3]
        $region20: #{tpu_custom_call.1} parent=11 // pred_fallthru
          _
      $region12: #{tpu_custom_call.1} parent=5 // pred_fallthru
        _
      %p172 = scmp.lt.s32.totalorder %s15, 2
      // Predicated region
      $region21: #{tpu_custom_call.1} parent=5 // pred_check
        %p173 = pneg %p172
      $region22: #{tpu_custom_call.1} parent=5 // pred_check_branch
        %175 = sbr.rel (%p173) target = $region24
      $region23: #{tpu_custom_call.1} parent=5 // pred_region
        // Predicated region
        $region25: #{tpu_custom_call.1} parent=23 // pred_check
          %p176 = pneg %p77
        $region26: #{tpu_custom_call.1} parent=23 // pred_check_branch
          %178 = sbr.rel (%p176) target = $region28
        $region27: #{tpu_custom_call.1} parent=23 // pred_region
          %s179 = sand.u32 %s15, 1
          %s180 = scalar_lea.sflag [#allocation7], %s179
          %s181 = sand.u32 %s67, 1
          %s182 = smul.addr %s181, 4
          %s183 = scalar_lea.vmem [#allocation6], %s182
          %s184 = smul.u32 4, %s15
          %186 = vsyncadd %s180, 0
          %s187 = scalar_lea.hbm %s2, %s184
          %s188 = sshll.u32 %s187, 4
          %s189 = int_to_ptr.hbm [resolvable:$true] %s188
          %s190 = sshll.u32 %s183, 4
          %s191 = int_to_ptr.vmem [resolvable:$true] %s190
          %196 = dma.hbm_to_vmem [thread:$0]  %s189, 64, %s191, %s180, 16, 16, 1
        $region28: #{tpu_custom_call.1} parent=23 // pred_fallthru
          _
        // Predicated region
        $region29: #{tpu_custom_call.1} parent=23 // pred_check
          %p197 = pneg %p103
        $region30: #{tpu_custom_call.1} parent=23 // pred_check_branch
          %199 = sbr.rel (%p197) target = $region32
        $region31: #{tpu_custom_call.1} parent=23 // pred_region
          %s200 = sand.u32 %s15, 1
          %s201 = scalar_lea.sflag [#allocation7], %s200
          %s202 = sand.u32 %s93, 1
          %s203 = smul.addr %s202, 64
          %s204 = scalar_lea.vmem [#allocation8], %s203
          %s205 = smul.u32 4, %s15
          %207 = vsyncadd %s201, 0
          %s208 = smul.addr %s205, 2
          %s209 = smul.addr %s208, 8
          %s210 = scalar_lea.hbm %s3, %s209
          %s211 = sshll.u32 %s210, 4
          %s212 = int_to_ptr.hbm [resolvable:$true] %s211
          %s213 = sshll.u32 %s204, 4
          %s214 = int_to_ptr.vmem [resolvable:$true] %s213
          %219 = dma.hbm_to_vmem [thread:$0]  %s212, 1024, %s214, %s201, 128, 128, 8
        $region32: #{tpu_custom_call.1} parent=23 // pred_fallthru
          _
      $region24: #{tpu_custom_call.1} parent=5 // pred_fallthru
        _
      %p220 = scmp.le.s32.totalorder 1, %s15
      %p221 = scmp.lt.s32.totalorder %s15, 3
      %p222 = pnand %p220, %p221
      %p223 = pneg %p222
      // Predicated region
      $region33: #{tpu_custom_call.1} parent=5 // pred_check
        _
      $region34: #{tpu_custom_call.1} parent=5 // pred_check_branch
        %225 = sbr.rel (%p222) target = $region36
      $region35: #{tpu_custom_call.1} parent=5 // pred_region
        %s226 = ssub.s32 %s15, 1
        // Predicated region
        $region37: #{tpu_custom_call.1} parent=35 // pred_check
          %p227 = pneg %p36
        $region38: #{tpu_custom_call.1} parent=35 // pred_check_branch
          %229 = sbr.rel (%p227) target = $region40
        $region39: #{tpu_custom_call.1} parent=35 // pred_region
          %231 = dma.done [#allocation4], 16
        $region40: #{tpu_custom_call.1} parent=35 // pred_fallthru
          _
        // Predicated region
        $region41: #{tpu_custom_call.1} parent=35 // pred_check
          %p232 = pneg %p57
        $region42: #{tpu_custom_call.1} parent=35 // pred_check_branch
          %234 = sbr.rel (%p232) target = $region44
        $region43: #{tpu_custom_call.1} parent=35 // pred_region
          %236 = dma.done [#allocation3], 128
        $region44: #{tpu_custom_call.1} parent=35 // pred_fallthru
          _
        %s237 = sand.u32 %s20, 1
        %s238 = scalar_lea.sflag [#allocation7], %s237
        %s239 = sand.u32 %s70, 1
        %s240 = smul.addr %s239, 4
        %s241 = scalar_lea.vmem [#allocation6], %s240
        // Predicated region
        $region45: #{tpu_custom_call.1} parent=35 // pred_check
          %p242 = pneg %p83
        $region46: #{tpu_custom_call.1} parent=35 // pred_check_branch
          %244 = sbr.rel (%p242) target = $region48
        $region47: #{tpu_custom_call.1} parent=35 // pred_region
          %246 = dma.done %s238, 64
        $region48: #{tpu_custom_call.1} parent=35 // pred_fallthru
          _
        %s247 = sand.u32 %s20, 1
        %s248 = scalar_lea.sflag [#allocation7], %s247
        %s249 = sand.u32 %s96, 1
        %s250 = smul.addr %s249, 64
        %s251 = scalar_lea.vmem [#allocation8], %s250
        // Predicated region
        $region49: #{tpu_custom_call.1} parent=35 // pred_check
          %p252 = pneg %p109
        $region50: #{tpu_custom_call.1} parent=35 // pred_check_branch
          %254 = sbr.rel (%p252) target = $region52
        $region51: #{tpu_custom_call.1} parent=35 // pred_region
          %256 = dma.done %s248, 1024
        $region52: #{tpu_custom_call.1} parent=35 // pred_fallthru
          _
        %257 = sfence
        %p258 = pneg %p36
        %p259 = pneg %p33
        %p260 = pneg %p57
        %p261 = pneg %p54
        %s262 = sand.u32 %s20, 1
        %s263 = scalar_lea.sflag [#allocation7], %s262
        %s264 = sand.u32 %s70, 1
        %s265 = smul.addr %s264, 4
        %s266 = scalar_lea.vmem [#allocation6], %s265
        %p267 = pneg %p83
        %p268 = pneg %p80
        %s269 = sand.u32 %s20, 1
        %s270 = scalar_lea.sflag [#allocation7], %s269
        %s271 = sand.u32 %s96, 1
        %s272 = smul.addr %s271, 64
        %s273 = scalar_lea.vmem [#allocation8], %s272
        %p274 = pneg %p109
        %p275 = pneg %p106
        %p276 = pneg %p135
        %p277 = pneg %p132
        %s278 = smul.u32 4, %s20
        %p279 = scmp.lt.s32.totalorder %s278, 7
        %s280 = scalar_select %p279, %s278, 7
        %s281 = smul.addr %s280, 4
        %s282 = scalar_lea.vmem %s4, %s281
        %s283 = smul.u32 4, %s20
        %s284 = smul.u32 4, %s20
        %s285 = smul.u32 4, %s20
        %p286 = scmp.lt.s32.totalorder %s285, 7
        %s287 = scalar_select %p286, %s285, 7
        %s288 = smul.addr %s287, 4
        %s289 = scalar_lea.vmem %s4, %s288
        %s290 = smul.u32 4, %s20
        %s291 = sld [smem:[#allocation2]]
        %s292 = sld [smem:[#allocation2 + $0x1]]
        %s293 = sld [smem:[#allocation2 + $0x2]]
        %s294 = sld [smem:[#allocation2 + $0x3]]
        %s295 = sld [smem:[#allocation2 + $0x4]]
        %v296 = vld [vmem:[#allocation5] sm:$0xff]
        %v297 = vld [vmem:[%s241] sm:$0x1]
        %v298 = vld [vmem:[%s241 + $0x1] sm:$0x1]
        %v299 = vld [vmem:[%s241 + $0x2] sm:$0x1]
        %v300 = vld [vmem:[%s241 + $0x3] sm:$0x1]
        %v301 = vld [vmem:[%s251] sm:$0xff]
        %v302 = vld [vmem:[%s251 + $0x8] sm:$0xff]
        %v303 = vld [vmem:[%s251 + $0x10] sm:$0xff]
        %v304 = vld [vmem:[%s251 + $0x18] sm:$0xff]
        %v305 = vld [vmem:[%s251 + $0x20] sm:$0xff]
        %v306 = vld [vmem:[%s251 + $0x28] sm:$0xff]
        %v307 = vld [vmem:[%s251 + $0x30] sm:$0xff]
        %v308 = vld [vmem:[%s251 + $0x38] sm:$0xff]
        %vm309 = vcmask 130048
        %v310 = vsel %vm309, %v301, 0.0
        %311 = vadd.xlane.f32.xlu0 %v310
        %v312 = vpop.xlane.xlu0 %311
        %v313 = vsel %vm309, %v302, 0.0
        %314 = vadd.xlane.f32.xlu0 %v313
        %v315 = vpop.xlane.xlu0 %314
        %v316 = vsel %vm309, %v303, 0.0
        %317 = vadd.xlane.f32.xlu0 %v316
        %v318 = vpop.xlane.xlu0 %317
        %v319 = vsel %vm309, %v304, 0.0
        %320 = vadd.xlane.f32.xlu0 %v319
        %v321 = vpop.xlane.xlu0 %320
        %v322 = vsel %vm309, %v305, 0.0
        %323 = vadd.xlane.f32.xlu0 %v322
        %v324 = vpop.xlane.xlu0 %323
        %v325 = vsel %vm309, %v306, 0.0
        %326 = vadd.xlane.f32.xlu0 %v325
        %v327 = vpop.xlane.xlu0 %326
        %v328 = vsel %vm309, %v307, 0.0
        %329 = vadd.xlane.f32.xlu0 %v328
        %v330 = vpop.xlane.xlu0 %329
        %v331 = vsel %vm309, %v308, 0.0
        %332 = vadd.xlane.f32.xlu0 %v331
        %v333 = vpop.xlane.xlu0 %332
        %v338 = vperm.slane %v297, 0
        %v339 = vperm.slane %v298, 0
        %v340 = vperm.slane %v299, 0
        %v341 = vperm.slane %v300, 0
        %v346 = vmul.f32 %v301, %v338
        %v347 = vmul.f32 %v302, %v338
        %v348 = vmul.f32 %v303, %v339
        %v349 = vmul.f32 %v304, %v339
        %v350 = vmul.f32 %v305, %v340
        %v351 = vmul.f32 %v306, %v340
        %v352 = vmul.f32 %v307, %v341
        %v353 = vmul.f32 %v308, %v341
        %v354 = vsel %vm309, %v346, 0.0
        %355 = vadd.xlane.f32.xlu0 %v354
        %v356 = vpop.xlane.xlu0 %355
        %v357 = vsel %vm309, %v347, 0.0
        %358 = vadd.xlane.f32.xlu0 %v357
        %v359 = vpop.xlane.xlu0 %358
        %v360 = vsel %vm309, %v348, 0.0
        %361 = vadd.xlane.f32.xlu0 %v360
        %v362 = vpop.xlane.xlu0 %361
        %v363 = vsel %vm309, %v349, 0.0
        %364 = vadd.xlane.f32.xlu0 %v363
        %v365 = vpop.xlane.xlu0 %364
        %v366 = vsel %vm309, %v350, 0.0
        %367 = vadd.xlane.f32.xlu0 %v366
        %v368 = vpop.xlane.xlu0 %367
        %v369 = vsel %vm309, %v351, 0.0
        %370 = vadd.xlane.f32.xlu0 %v369
        %v371 = vpop.xlane.xlu0 %370
        %v372 = vsel %vm309, %v352, 0.0
        %373 = vadd.xlane.f32.xlu0 %v372
        %v374 = vpop.xlane.xlu0 %373
        %v375 = vsel %vm309, %v353, 0.0
        %376 = vadd.xlane.f32.xlu0 %v375
        %v377 = vpop.xlane.xlu0 %376
        %v378 = vstv %s291
        %v379 = vmul.f32 %v378, %v356
        %v380 = vmul.f32 %v378, %v359
        %v381 = vmul.f32 %v378, %v362
        %v382 = vmul.f32 %v378, %v365
        %v383 = vmul.f32 %v378, %v368
        %v384 = vmul.f32 %v378, %v371
        %v385 = vmul.f32 %v378, %v374
        %v386 = vmul.f32 %v378, %v377
        %v387 = vstv %s292
        %v388 = vmul.f32 %v387, %v312
        %v389 = vmul.f32 %v387, %v315
        %v390 = vmul.f32 %v387, %v318
        %v391 = vmul.f32 %v387, %v321
        %v392 = vmul.f32 %v387, %v324
        %v393 = vmul.f32 %v387, %v327
        %v394 = vmul.f32 %v387, %v330
        %v395 = vmul.f32 %v387, %v333
        %v396 = vadd.f32 %v379, %v388
        %v397 = vadd.f32 %v380, %v389
        %v398 = vadd.f32 %v381, %v390
        %v399 = vadd.f32 %v382, %v391
        %v400 = vadd.f32 %v383, %v392
        %v401 = vadd.f32 %v384, %v393
        %v402 = vadd.f32 %v385, %v394
        %v403 = vadd.f32 %v386, %v395
        %v404 = vstv %s293
        %v405 = vmul.f32 %v404, %v297
        %v406 = vmul.f32 %v404, %v298
        %v407 = vmul.f32 %v404, %v299
        %v408 = vmul.f32 %v404, %v300
        %v409 = vstv %s294
        %v410 = vadd.f32 %v405, %v409
        %v411 = vadd.f32 %v406, %v409
        %v412 = vadd.f32 %v407, %v409
        %v413 = vadd.f32 %v408, %v409
        %v414 = vxor.u32 %v410, 2147483648
        %v415 = vxor.u32 %v411, 2147483648
        %v416 = vxor.u32 %v412, 2147483648
        %v417 = vxor.u32 %v413, 2147483648
        %v418 = vmul.f32 %v414, 1.442695
        %v419 = vpow.pop %v418
        %v420 = vmul.f32 %v415, 1.442695
        %v421 = vpow.pop %v420
        %v422 = vmul.f32 %v416, 1.442695
        %v423 = vpow.pop %v422
        %v424 = vmul.f32 %v417, 1.442695
        %v425 = vpow.pop %v424
        %v426 = vadd.f32 %v419, 1.0
        %v427 = vadd.f32 %v421, 1.0
        %v428 = vadd.f32 %v423, 1.0
        %v429 = vadd.f32 %v425, 1.0
        %v430 = vrcp.pop %v426
        %v431 = vmul.f32 %v426, %v430
        %v432 = vsub.f32 1.0, %v431
        %v433 = vmul.f32 %v430, %v432
        %v434 = vadd.f32 %v430, %v433
        %vm435 = vweird.f32 %v426
        %vm436 = vweird.f32 %v430
        %vm437 = vmor %vm435, %vm436
        %v438 = vsel %vm437, %v430, %v434
        %v439 = vand.u32 2147483647, %v426
        %vm440 = vcmp.eq.f32.partialorder %v439, 8.507059e+37
        %v441 = vand.u32 %v426, 2147483648
        %v442 = vor.u32 1.1754944e-38, %v441
        %v443 = vsel %vm440, %v442, %v438
        %v444 = vmul.f32 1.0, %v443
        %v445 = vrcp.pop %v427
        %v446 = vmul.f32 %v427, %v445
        %v447 = vsub.f32 1.0, %v446
        %v448 = vmul.f32 %v445, %v447
        %v449 = vadd.f32 %v445, %v448
        %vm450 = vweird.f32 %v427
        %vm451 = vweird.f32 %v445
        %vm452 = vmor %vm450, %vm451
        %v453 = vsel %vm452, %v445, %v449
        %v454 = vand.u32 2147483647, %v427
        %vm455 = vcmp.eq.f32.partialorder %v454, 8.507059e+37
        %v456 = vand.u32 %v427, 2147483648
        %v457 = vor.u32 1.1754944e-38, %v456
        %v458 = vsel %vm455, %v457, %v453
        %v459 = vmul.f32 1.0, %v458
        %v460 = vrcp.pop %v428
        %v461 = vmul.f32 %v428, %v460
        %v462 = vsub.f32 1.0, %v461
        %v463 = vmul.f32 %v460, %v462
        %v464 = vadd.f32 %v460, %v463
        %vm465 = vweird.f32 %v428
        %vm466 = vweird.f32 %v460
        %vm467 = vmor %vm465, %vm466
        %v468 = vsel %vm467, %v460, %v464
        %v469 = vand.u32 2147483647, %v428
        %vm470 = vcmp.eq.f32.partialorder %v469, 8.507059e+37
        %v471 = vand.u32 %v428, 2147483648
        %v472 = vor.u32 1.1754944e-38, %v471
        %v473 = vsel %vm470, %v472, %v468
        %v474 = vmul.f32 1.0, %v473
        %v475 = vrcp.pop %v429
        %v476 = vmul.f32 %v429, %v475
        %v477 = vsub.f32 1.0, %v476
        %v478 = vmul.f32 %v475, %v477
        %v479 = vadd.f32 %v475, %v478
        %vm480 = vweird.f32 %v429
        %vm481 = vweird.f32 %v475
        %vm482 = vmor %vm480, %vm481
        %v483 = vsel %vm482, %v475, %v479
        %v484 = vand.u32 2147483647, %v429
        %vm485 = vcmp.eq.f32.partialorder %v484, 8.507059e+37
        %v486 = vand.u32 %v429, 2147483648
        %v487 = vor.u32 1.1754944e-38, %v486
        %v488 = vsel %vm485, %v487, %v483
        %v489 = vmul.f32 1.0, %v488
        %v494 = vperm.slane %v444, 0
        %v495 = vperm.slane %v459, 0
        %v496 = vperm.slane %v474, 0
        %v497 = vperm.slane %v489, 0
        %v498 = vlaneseq
        %v499 = vshrl.u32 %v498, 7
        %501 = vset.pattern.permute.xlu0 %v499
        %502 = vperm.xlu0 %501, %v494
        %v503 = vpop.permute.xlu0 %502
        %v504 = vlaneseq
        %v505 = vshrl.u32 %v504, 7
        %v506 = vadd.s32 %v505, 8
        %507 = vset.pattern.permute.xlu0 %v506
        %508 = vperm.xlu0 %507, %v494
        %v509 = vpop.permute.xlu0 %508
        %v510 = vlaneseq
        %v511 = vshrl.u32 %v510, 7
        %513 = vset.pattern.permute.xlu0 %v511
        %514 = vperm.xlu0 %513, %v495
        %v515 = vpop.permute.xlu0 %514
        %v516 = vlaneseq
        %v517 = vshrl.u32 %v516, 7
        %v518 = vadd.s32 %v517, 8
        %519 = vset.pattern.permute.xlu0 %v518
        %520 = vperm.xlu0 %519, %v495
        %v521 = vpop.permute.xlu0 %520
        %v522 = vlaneseq
        %v523 = vshrl.u32 %v522, 7
        %525 = vset.pattern.permute.xlu0 %v523
        %526 = vperm.xlu0 %525, %v496
        %v527 = vpop.permute.xlu0 %526
        %v528 = vlaneseq
        %v529 = vshrl.u32 %v528, 7
        %v530 = vadd.s32 %v529, 8
        %531 = vset.pattern.permute.xlu0 %v530
        %532 = vperm.xlu0 %531, %v496
        %v533 = vpop.permute.xlu0 %532
        %v534 = vlaneseq
        %v535 = vshrl.u32 %v534, 7
        %537 = vset.pattern.permute.xlu0 %v535
        %538 = vperm.xlu0 %537, %v497
        %v539 = vpop.permute.xlu0 %538
        %v540 = vlaneseq
        %v541 = vshrl.u32 %v540, 7
        %v542 = vadd.s32 %v541, 8
        %543 = vset.pattern.permute.xlu0 %v542
        %544 = vperm.xlu0 %543, %v497
        %v545 = vpop.permute.xlu0 %544
        %v554 = vmul.f32 %v396, %v503
        %v555 = vmul.f32 %v397, %v509
        %v556 = vmul.f32 %v398, %v515
        %v557 = vmul.f32 %v399, %v521
        %v558 = vmul.f32 %v400, %v527
        %v559 = vmul.f32 %v401, %v533
        %v560 = vmul.f32 %v402, %v539
        %v561 = vmul.f32 %v403, %v545
        %v562 = vmax.f32 %v554, 0.0
        %v563 = vmax.f32 %v555, 0.0
        %v564 = vmax.f32 %v556, 0.0
        %v565 = vmax.f32 %v557, 0.0
        %v566 = vmax.f32 %v558, 0.0
        %v567 = vmax.f32 %v559, 0.0
        %v568 = vmax.f32 %v560, 0.0
        %v569 = vmax.f32 %v561, 0.0
        %578 = vset.pattern.permute.xlu0 0
        %579 = vperm.xlu0 %578, %v562
        %v580 = vpop.permute.xlu0 %579
        %581 = vset.pattern.permute.xlu0 0
        %582 = vperm.xlu0 %581, %v563
        %v583 = vpop.permute.xlu0 %582
        %584 = vset.pattern.permute.xlu0 0
        %585 = vperm.xlu0 %584, %v564
        %v586 = vpop.permute.xlu0 %585
        %587 = vset.pattern.permute.xlu0 0
        %588 = vperm.xlu0 %587, %v565
        %v589 = vpop.permute.xlu0 %588
        %590 = vset.pattern.permute.xlu0 0
        %591 = vperm.xlu0 %590, %v566
        %v592 = vpop.permute.xlu0 %591
        %593 = vset.pattern.permute.xlu0 0
        %594 = vperm.xlu0 %593, %v567
        %v595 = vpop.permute.xlu0 %594
        %596 = vset.pattern.permute.xlu0 0
        %597 = vperm.xlu0 %596, %v568
        %v598 = vpop.permute.xlu0 %597
        %599 = vset.pattern.permute.xlu0 0
        %600 = vperm.xlu0 %599, %v569
        %v601 = vpop.permute.xlu0 %600
        %v602 = vlaneseq
        %v603 = vand.u32 %v602, 127
        %v604 = vperm.slane %v580, %v603
        %v605 = vadd.s32 %v603, 4294967288
        %v606 = vperm.slane %v583, %v605
        %vm607 = vcmask 130112
        %v608 = vsel %vm607, %v606, %v604
        %v609 = vperm.slane %v586, %v603
        %v610 = vperm.slane %v589, %v605
        %v611 = vsel %vm607, %v610, %v609
        %v612 = vperm.slane %v592, %v603
        %v613 = vperm.slane %v595, %v605
        %v614 = vsel %vm607, %v613, %v612
        %v615 = vperm.slane %v598, %v603
        %v616 = vperm.slane %v601, %v605
        %v617 = vsel %vm607, %v616, %v615
        %vm618 = vcmask 1041409
        %vm619 = vcmask 1042434
        %v620 = vsel %vm619, %v608, %v608
        %vm621 = vcmask 1043459
        %v622 = vsel %vm621, %v608, %v620
        %vm623 = vcmask 1044484
        %v624 = vsel %vm623, %v608, %v622
        %vm625 = vcmask 1045509
        %v626 = vsel %vm625, %v608, %v624
        %vm627 = vcmask 1046534
        %v628 = vsel %vm627, %v608, %v626
        %vm629 = vcmask 1047559
        %v630 = vsel %vm629, %v608, %v628
        %v631 = vsel %vm619, %v611, %v611
        %v632 = vsel %vm621, %v611, %v631
        %v633 = vsel %vm623, %v611, %v632
        %v634 = vsel %vm625, %v611, %v633
        %v635 = vsel %vm627, %v611, %v634
        %v636 = vsel %vm629, %v611, %v635
        %v637 = vsel %vm619, %v614, %v614
        %v638 = vsel %vm621, %v614, %v637
        %v639 = vsel %vm623, %v614, %v638
        %v640 = vsel %vm625, %v614, %v639
        %v641 = vsel %vm627, %v614, %v640
        %v642 = vsel %vm629, %v614, %v641
        %v643 = vsel %vm619, %v617, %v617
        %v644 = vsel %vm621, %v617, %v643
        %v645 = vsel %vm623, %v617, %v644
        %v646 = vsel %vm625, %v617, %v645
        %v647 = vsel %vm627, %v617, %v646
        %v648 = vsel %vm629, %v617, %v647
        %v653 = vmul.f32 %v301, %v630
        %v654 = vmul.f32 %v302, %v630
        %v655 = vmul.f32 %v303, %v636
        %v656 = vmul.f32 %v304, %v636
        %v657 = vmul.f32 %v305, %v642
        %v658 = vmul.f32 %v306, %v642
        %v659 = vmul.f32 %v307, %v648
        %v660 = vmul.f32 %v308, %v648
        %v661 = vsel %vm309, %v653, 0.0
        %662 = vadd.xlane.f32.xlu0 %v661
        %v663 = vpop.xlane.xlu0 %662
        %v664 = vsel %vm309, %v654, 0.0
        %665 = vadd.xlane.f32.xlu0 %v664
        %v666 = vpop.xlane.xlu0 %665
        %v667 = vsel %vm309, %v655, 0.0
        %668 = vadd.xlane.f32.xlu0 %v667
        %v669 = vpop.xlane.xlu0 %668
        %v670 = vsel %vm309, %v656, 0.0
        %671 = vadd.xlane.f32.xlu0 %v670
        %v672 = vpop.xlane.xlu0 %671
        %v673 = vsel %vm309, %v657, 0.0
        %674 = vadd.xlane.f32.xlu0 %v673
        %v675 = vpop.xlane.xlu0 %674
        %v676 = vsel %vm309, %v658, 0.0
        %677 = vadd.xlane.f32.xlu0 %v676
        %v678 = vpop.xlane.xlu0 %677
        %v679 = vsel %vm309, %v659, 0.0
        %680 = vadd.xlane.f32.xlu0 %v679
        %v681 = vpop.xlane.xlu0 %680
        %v682 = vsel %vm309, %v660, 0.0
        %683 = vadd.xlane.f32.xlu0 %v682
        %v684 = vpop.xlane.xlu0 %683
        %v685 = vperm.slane %v296, 0
        %v686 = vmul.f32 %v663, %v685
        %v687 = vmul.f32 %v666, %v685
        %v688 = vmul.f32 %v669, %v685
        %v689 = vmul.f32 %v672, %v685
        %v690 = vmul.f32 %v675, %v685
        %v691 = vmul.f32 %v678, %v685
        %v692 = vmul.f32 %v681, %v685
        %v693 = vmul.f32 %v684, %v685
        %v694 = vperm.slane %v296, 1
        %v695 = vmul.f32 %v312, %v694
        %v696 = vmul.f32 %v315, %v694
        %v697 = vmul.f32 %v318, %v694
        %v698 = vmul.f32 %v321, %v694
        %v699 = vmul.f32 %v324, %v694
        %v700 = vmul.f32 %v327, %v694
        %v701 = vmul.f32 %v330, %v694
        %v702 = vmul.f32 %v333, %v694
        %v703 = vadd.f32 %v686, %v695
        %v704 = vadd.f32 %v687, %v696
        %v705 = vadd.f32 %v688, %v697
        %v706 = vadd.f32 %v689, %v698
        %v707 = vadd.f32 %v690, %v699
        %v708 = vadd.f32 %v691, %v700
        %v709 = vadd.f32 %v692, %v701
        %v710 = vadd.f32 %v693, %v702
        %v719 = vperm.slane %v296, 2
        %v720 = vmul.f32 %v580, %v719
        %v721 = vmul.f32 %v583, %v719
        %v722 = vmul.f32 %v586, %v719
        %v723 = vmul.f32 %v589, %v719
        %v724 = vmul.f32 %v592, %v719
        %v725 = vmul.f32 %v595, %v719
        %v726 = vmul.f32 %v598, %v719
        %v727 = vmul.f32 %v601, %v719
        %v728 = vperm.slane %v296, 3
        %v729 = vadd.f32 %v720, %v728
        %v730 = vadd.f32 %v721, %v728
        %v731 = vadd.f32 %v722, %v728
        %v732 = vadd.f32 %v723, %v728
        %v733 = vadd.f32 %v724, %v728
        %v734 = vadd.f32 %v725, %v728
        %v735 = vadd.f32 %v726, %v728
        %v736 = vadd.f32 %v727, %v728
        %v737 = vxor.u32 %v729, 2147483648
        %v738 = vxor.u32 %v730, 2147483648
        %v739 = vxor.u32 %v731, 2147483648
        %v740 = vxor.u32 %v732, 2147483648
        %v741 = vxor.u32 %v733, 2147483648
        %v742 = vxor.u32 %v734, 2147483648
        %v743 = vxor.u32 %v735, 2147483648
        %v744 = vxor.u32 %v736, 2147483648
        %v745 = vmul.f32 %v737, 1.442695
        %v746 = vpow.pop %v745
        %v747 = vmul.f32 %v738, 1.442695
        %v748 = vpow.pop %v747
        %v749 = vmul.f32 %v739, 1.442695
        %v750 = vpow.pop %v749
        %v751 = vmul.f32 %v740, 1.442695
        %v752 = vpow.pop %v751
        %v753 = vmul.f32 %v741, 1.442695
        %v754 = vpow.pop %v753
        %v755 = vmul.f32 %v742, 1.442695
        %v756 = vpow.pop %v755
        %v757 = vmul.f32 %v743, 1.442695
        %v758 = vpow.pop %v757
        %v759 = vmul.f32 %v744, 1.442695
        %v760 = vpow.pop %v759
        %v761 = vadd.f32 %v746, 1.0
        %v762 = vadd.f32 %v748, 1.0
        %v763 = vadd.f32 %v750, 1.0
        %v764 = vadd.f32 %v752, 1.0
        %v765 = vadd.f32 %v754, 1.0
        %v766 = vadd.f32 %v756, 1.0
        %v767 = vadd.f32 %v758, 1.0
        %v768 = vadd.f32 %v760, 1.0
        %v769 = vrcp.pop %v761
        %v770 = vmul.f32 %v761, %v769
        %v771 = vsub.f32 1.0, %v770
        %v772 = vmul.f32 %v769, %v771
        %v773 = vadd.f32 %v769, %v772
        %vm774 = vweird.f32 %v761
        %vm775 = vweird.f32 %v769
        %vm776 = vmor %vm774, %vm775
        %v777 = vsel %vm776, %v769, %v773
        %v778 = vand.u32 2147483647, %v761
        %vm779 = vcmp.eq.f32.partialorder %v778, 8.507059e+37
        %v780 = vand.u32 %v761, 2147483648
        %v781 = vor.u32 1.1754944e-38, %v780
        %v782 = vsel %vm779, %v781, %v777
        %v783 = vmul.f32 1.0, %v782
        %v784 = vrcp.pop %v762
        %v785 = vmul.f32 %v762, %v784
        %v786 = vsub.f32 1.0, %v785
        %v787 = vmul.f32 %v784, %v786
        %v788 = vadd.f32 %v784, %v787
        %vm789 = vweird.f32 %v762
        %vm790 = vweird.f32 %v784
        %vm791 = vmor %vm789, %vm790
        %v792 = vsel %vm791, %v784, %v788
        %v793 = vand.u32 2147483647, %v762
        %vm794 = vcmp.eq.f32.partialorder %v793, 8.507059e+37
        %v795 = vand.u32 %v762, 2147483648
        %v796 = vor.u32 1.1754944e-38, %v795
        %v797 = vsel %vm794, %v796, %v792
        %v798 = vmul.f32 1.0, %v797
        %v799 = vrcp.pop %v763
        %v800 = vmul.f32 %v763, %v799
        %v801 = vsub.f32 1.0, %v800
        %v802 = vmul.f32 %v799, %v801
        %v803 = vadd.f32 %v799, %v802
        %vm804 = vweird.f32 %v763
        %vm805 = vweird.f32 %v799
        %vm806 = vmor %vm804, %vm805
        %v807 = vsel %vm806, %v799, %v803
        %v808 = vand.u32 2147483647, %v763
        %vm809 = vcmp.eq.f32.partialorder %v808, 8.507059e+37
        %v810 = vand.u32 %v763, 2147483648
        %v811 = vor.u32 1.1754944e-38, %v810
        %v812 = vsel %vm809, %v811, %v807
        %v813 = vmul.f32 1.0, %v812
        %v814 = vrcp.pop %v764
        %v815 = vmul.f32 %v764, %v814
        %v816 = vsub.f32 1.0, %v815
        %v817 = vmul.f32 %v814, %v816
        %v818 = vadd.f32 %v814, %v817
        %vm819 = vweird.f32 %v764
        %vm820 = vweird.f32 %v814
        %vm821 = vmor %vm819, %vm820
        %v822 = vsel %vm821, %v814, %v818
        %v823 = vand.u32 2147483647, %v764
        %vm824 = vcmp.eq.f32.partialorder %v823, 8.507059e+37
        %v825 = vand.u32 %v764, 2147483648
        %v826 = vor.u32 1.1754944e-38, %v825
        %v827 = vsel %vm824, %v826, %v822
        %v828 = vmul.f32 1.0, %v827
        %v829 = vrcp.pop %v765
        %v830 = vmul.f32 %v765, %v829
        %v831 = vsub.f32 1.0, %v830
        %v832 = vmul.f32 %v829, %v831
        %v833 = vadd.f32 %v829, %v832
        %vm834 = vweird.f32 %v765
        %vm835 = vweird.f32 %v829
        %vm836 = vmor %vm834, %vm835
        %v837 = vsel %vm836, %v829, %v833
        %v838 = vand.u32 2147483647, %v765
        %vm839 = vcmp.eq.f32.partialorder %v838, 8.507059e+37
        %v840 = vand.u32 %v765, 2147483648
        %v841 = vor.u32 1.1754944e-38, %v840
        %v842 = vsel %vm839, %v841, %v837
        %v843 = vmul.f32 1.0, %v842
        %v844 = vrcp.pop %v766
        %v845 = vmul.f32 %v766, %v844
        %v846 = vsub.f32 1.0, %v845
        %v847 = vmul.f32 %v844, %v846
        %v848 = vadd.f32 %v844, %v847
        %vm849 = vweird.f32 %v766
        %vm850 = vweird.f32 %v844
        %vm851 = vmor %vm849, %vm850
        %v852 = vsel %vm851, %v844, %v848
        %v853 = vand.u32 2147483647, %v766
        %vm854 = vcmp.eq.f32.partialorder %v853, 8.507059e+37
        %v855 = vand.u32 %v766, 2147483648
        %v856 = vor.u32 1.1754944e-38, %v855
        %v857 = vsel %vm854, %v856, %v852
        %v858 = vmul.f32 1.0, %v857
        %v859 = vrcp.pop %v767
        %v860 = vmul.f32 %v767, %v859
        %v861 = vsub.f32 1.0, %v860
        %v862 = vmul.f32 %v859, %v861
        %v863 = vadd.f32 %v859, %v862
        %vm864 = vweird.f32 %v767
        %vm865 = vweird.f32 %v859
        %vm866 = vmor %vm864, %vm865
        %v867 = vsel %vm866, %v859, %v863
        %v868 = vand.u32 2147483647, %v767
        %vm869 = vcmp.eq.f32.partialorder %v868, 8.507059e+37
        %v870 = vand.u32 %v767, 2147483648
        %v871 = vor.u32 1.1754944e-38, %v870
        %v872 = vsel %vm869, %v871, %v867
        %v873 = vmul.f32 1.0, %v872
        %v874 = vrcp.pop %v768
        %v875 = vmul.f32 %v768, %v874
        %v876 = vsub.f32 1.0, %v875
        %v877 = vmul.f32 %v874, %v876
        %v878 = vadd.f32 %v874, %v877
        %vm879 = vweird.f32 %v768
        %vm880 = vweird.f32 %v874
        %vm881 = vmor %vm879, %vm880
        %v882 = vsel %vm881, %v874, %v878
        %v883 = vand.u32 2147483647, %v768
        %vm884 = vcmp.eq.f32.partialorder %v883, 8.507059e+37
        %v885 = vand.u32 %v768, 2147483648
        %v886 = vor.u32 1.1754944e-38, %v885
        %v887 = vsel %vm884, %v886, %v882
        %v888 = vmul.f32 1.0, %v887
        %v889 = vmul.f32 %v703, %v783
        %v890 = vmul.f32 %v704, %v798
        %v891 = vmul.f32 %v705, %v813
        %v892 = vmul.f32 %v706, %v828
        %v893 = vmul.f32 %v707, %v843
        %v894 = vmul.f32 %v708, %v858
        %v895 = vmul.f32 %v709, %v873
        %v896 = vmul.f32 %v710, %v888
        %v897 = vmax.f32 %v889, 0.0
        %v898 = vmax.f32 %v890, 0.0
        %v899 = vmax.f32 %v891, 0.0
        %v900 = vmax.f32 %v892, 0.0
        %v901 = vmax.f32 %v893, 0.0
        %v902 = vmax.f32 %v894, 0.0
        %v903 = vmax.f32 %v895, 0.0
        %v904 = vmax.f32 %v896, 0.0
        %vm905 = vcmask 64512
        %v906 = vsel %vm905, %v897, 0.0
        %v907 = vsel %vm905, %v898, 0.0
        %v908 = vadd.f32 %v906, %v907
        %v909 = vrot.slane %v908, 4
        %v910 = vadd.f32 %v908, %v909
        %v911 = vrot.slane %v910, 2
        %v912 = vadd.f32 %v910, %v911
        %v913 = vrot.slane %v912, 1
        %v914 = vadd.f32 %v912, %v913
        %v915 = vsel %vm905, %v899, 0.0
        %v916 = vsel %vm905, %v900, 0.0
        %v917 = vadd.f32 %v915, %v916
        %v918 = vrot.slane %v917, 4
        %v919 = vadd.f32 %v917, %v918
        %v920 = vrot.slane %v919, 2
        %v921 = vadd.f32 %v919, %v920
        %v922 = vrot.slane %v921, 1
        %v923 = vadd.f32 %v921, %v922
        %v924 = vsel %vm905, %v901, 0.0
        %v925 = vsel %vm905, %v902, 0.0
        %v926 = vadd.f32 %v924, %v925
        %v927 = vrot.slane %v926, 4
        %v928 = vadd.f32 %v926, %v927
        %v929 = vrot.slane %v928, 2
        %v930 = vadd.f32 %v928, %v929
        %v931 = vrot.slane %v930, 1
        %v932 = vadd.f32 %v930, %v931
        %v933 = vsel %vm905, %v903, 0.0
        %v934 = vsel %vm905, %v904, 0.0
        %v935 = vadd.f32 %v933, %v934
        %v936 = vrot.slane %v935, 4
        %v937 = vadd.f32 %v935, %v936
        %v938 = vrot.slane %v937, 2
        %v939 = vadd.f32 %v937, %v938
        %v940 = vrot.slane %v939, 1
        %v941 = vadd.f32 %v939, %v940
        %v942 = vrcp.pop 16.0
        %v943 = vmul.f32 16.0, %v942
        %v944 = vsub.f32 1.0, %v943
        %v945 = vmul.f32 %v942, %v944
        %v946 = vadd.f32 %v942, %v945
        %vm947 = vweird.f32 %v942
        %v948 = vsel %vm947, %v942, %v946
        %v949 = vmul.f32 %v914, %v948
        %v950 = vmul.f32 %v923, %v948
        %v951 = vmul.f32 %v932, %v948
        %v952 = vmul.f32 %v941, %v948
        %v953 = vperm.slane %v296, 4
        %v954 = vmul.f32 %v949, %v953
        %v955 = vmul.f32 %v950, %v953
        %v956 = vmul.f32 %v951, %v953
        %v957 = vmul.f32 %v952, %v953
        %v962 = vrot.slane %v955, 7
        %v963 = vsel %vm618, %v962, %v954
        %v964 = vrot.slane %v956, 6
        %v965 = vsel %vm619, %v964, %v963
        %v966 = vrot.slane %v957, 5
        %v967 = vsel %vm621, %v966, %v965
        %vm969 = vcmask 60416
        %v970 = vsel %vm969, %v967, 0.0
        %971 = vadd.xlane.f32.xlu0 %v970
        %v972 = vpop.xlane.xlu0 %971
        %v973 = vstv %s295
        %v974 = vadd.f32 %v972, %v973
        %v975 = vmul.f32 %v404, %v974
        %v976 = vadd.f32 %v975, %v409
        %v977 = vxor.u32 %v976, 2147483648
        %v978 = vmul.f32 %v977, 1.442695
        %v979 = vpow.pop %v978
        %v980 = vadd.f32 %v979, 1.0
        %v981 = vrcp.pop %v980
        %v982 = vmul.f32 %v980, %v981
        %v983 = vsub.f32 1.0, %v982
        %v984 = vmul.f32 %v981, %v983
        %v985 = vadd.f32 %v981, %v984
        %vm986 = vweird.f32 %v980
        %vm987 = vweird.f32 %v981
        %vm988 = vmor %vm986, %vm987
        %v989 = vsel %vm988, %v981, %v985
        %v990 = vand.u32 2147483647, %v980
        %vm991 = vcmp.eq.f32.partialorder %v990, 8.507059e+37
        %v992 = vand.u32 %v980, 2147483648
        %v993 = vor.u32 1.1754944e-38, %v992
        %v994 = vsel %vm991, %v993, %v989
        %v995 = vmul.f32 1.0, %v994
        %v996 = vmul.f32 %v974, %v719
        %v997 = vadd.f32 %v996, %v728
        %v998 = vxor.u32 %v997, 2147483648
        %v999 = vmul.f32 %v998, 1.442695
        %v1000 = vpow.pop %v999
        %v1001 = vadd.f32 %v1000, 1.0
        %v1002 = vrcp.pop %v1001
        %v1003 = vmul.f32 %v1001, %v1002
        %v1004 = vsub.f32 1.0, %v1003
        %v1005 = vmul.f32 %v1002, %v1004
        %v1006 = vadd.f32 %v1002, %v1005
        %vm1007 = vweird.f32 %v1001
        %vm1008 = vweird.f32 %v1002
        %vm1009 = vmor %vm1007, %vm1008
        %v1010 = vsel %vm1009, %v1002, %v1006
        %v1011 = vand.u32 2147483647, %v1001
        %vm1012 = vcmp.eq.f32.partialorder %v1011, 8.507059e+37
        %v1013 = vand.u32 %v1001, 2147483648
        %v1014 = vor.u32 1.1754944e-38, %v1013
        %v1015 = vsel %vm1012, %v1014, %v1010
        %v1016 = vmul.f32 1.0, %v1015
        %v1018 = vperm.slane %v974, 0
        %v1019 = vperm.slane %v974, 1
        %v1020 = vperm.slane %v974, 2
        %v1021 = vperm.slane %v974, 3
        %v1027 = vperm.slane %v995, 0
        %v1028 = vperm.slane %v995, 1
        %v1029 = vperm.slane %v995, 2
        %v1030 = vperm.slane %v995, 3
        %v1036 = vrot.slane %v1016, 1
        %v1037 = vrot.slane %v1016, 2
        %v1038 = vrot.slane %v1016, 3
        %v1039 = vperm.slane %v1016, 0
        %v1040 = vperm.slane %v1036, 0
        %v1041 = vperm.slane %v1037, 0
        %v1042 = vperm.slane %v1038, 0
        %vm1047 = vcmask 1040384
        %v1048 = vsel %vm1047, %v1018, %v1027
        %v1049 = vsel %vm1047, %v1019, %v1028
        %v1050 = vsel %vm1047, %v1020, %v1029
        %v1051 = vsel %vm1047, %v1021, %v1030
        %vm1052 = vcmask 1041408
        %v1053 = vsel %vm1052, %v1048, %v1039
        %v1054 = vsel %vm1052, %v1049, %v1040
        %v1055 = vsel %vm1052, %v1050, %v1041
        %v1056 = vsel %vm1052, %v1051, %v1042
        %vm1057 = vcmask 59392
        %1058 = vst.msk [vmem:[%s289] sm:$0x7] %vm1057, %v1053
        %1059 = vst.msk [vmem:[%s289 + $0x4] sm:$0x7] %vm1057, %v1054
        %1060 = vst.msk [vmem:[%s289 + $0x8] sm:$0x7] %vm1057, %v1055
        %1061 = vst.msk [vmem:[%s289 + $0xc] sm:$0x7] %vm1057, %v1056
        %s1062 = smul.u32 4, %s20
        %p1063 = scmp.lt.s32.totalorder %s1062, 7
        %s1064 = scalar_select %p1063, %s1062, 7
        %s1065 = smul.addr %s1064, 4
        %s1066 = scalar_lea.vmem %s4, %s1065
        // Predicated region
        $region53: #{tpu_custom_call.1} parent=35 // pred_check
          %p1067 = pneg %p132
        $region54: #{tpu_custom_call.1} parent=35 // pred_check_branch
          %1069 = sbr.rel (%p1067) target = $region56
        $region55: #{tpu_custom_call.1} parent=35 // pred_region
          %s1070 = smul.u32 4, %s20
        $region56: #{tpu_custom_call.1} parent=35 // pred_fallthru
          _
      $region36: #{tpu_custom_call.1} parent=5 // pred_fallthru
        _
      %p1071 = scmp.le.s32.totalorder 2, %s15
      // Predicated region
      $region57: #{tpu_custom_call.1} parent=5 // pred_check
        %p1072 = pneg %p1071
      $region58: #{tpu_custom_call.1} parent=5 // pred_check_branch
        %1074 = sbr.rel (%p1072) target = $region60
      $region59: #{tpu_custom_call.1} parent=5 // pred_region
        %s1075 = ssub.s32 %s15, 2
        // Predicated region
        $region61: #{tpu_custom_call.1} parent=59 // pred_check
          %p1076 = pneg %p138
        $region62: #{tpu_custom_call.1} parent=59 // pred_check_branch
          %1078 = sbr.rel (%p1076) target = $region64
        $region63: #{tpu_custom_call.1} parent=59 // pred_region
          %s1079 = smul.u32 4, %s21
          %p1080 = scmp.lt.s32.totalorder %s1079, 7
          %s1081 = scalar_select %p1080, %s1079, 7
          %s1082 = smul.addr %s1081, 4
          %s1083 = scalar_lea.vmem %s4, %s1082
        $region64: #{tpu_custom_call.1} parent=59 // pred_fallthru
          _
      $region60: #{tpu_custom_call.1} parent=5 // pred_fallthru
        _
    $region6: #{tpu_custom_call.1} parent=1 // loop_footer
      %s19 = sadd.s32 1, %s15
    $region7: #{tpu_custom_call.1} parent=1 // loop_footer_branch
      %14 = sbr.rel target = $region3
    $region8: #{tpu_custom_call.1} parent=1 // loop_exit
      _
    %1084 = vsyncpa [#allocation3], 1
    %s1085 = scalar_lea.sflag [#allocation3], 1
    %1086 = vsyncpa %s1085, 1
    %1087 = vsyncpa [#allocation7], 1
    %s1088 = scalar_lea.sflag [#allocation7], 1
    %1089 = vsyncpa %s1088, 1
    %1090 = vsyncpa [#allocation4], 1
    %s1091 = scalar_lea.sflag [#allocation4], 1
    %1092 = vsyncpa %s1091, 1

</llo_original>
